<compile_context>
chip_gen: v7x
topology: tpu7x:2x2x1
jax: 0.10.0
libtpu: 0.0.40
codegen_flags: <defaults>
</compile_context>

<pallas_src>
import functools

import jax
import jax.numpy as jnp
from jax.experimental import pallas as pl
from jax.experimental.pallas import tpu as pltpu

_NEG_LARGE = -1e30  # -inf-safe filler for padded logit columns


def _soft_logistic_kernel(x_ref, wt_ref, b_ref, y_ref, out_ref, *, compute_dtype):
    # x: [TB, IN], wt: [IN, OUT_P], b: [1, OUT_P], y: [TB, OUT_P]
    x = x_ref[...].astype(compute_dtype)
    wt = wt_ref[...].astype(compute_dtype)

    # MXU matmul with f32 accumulation; bias add in f32.
    logits = jnp.dot(x, wt, preferred_element_type=jnp.float32) + b_ref[...]

    # Numerically stable row-wise log-sum-exp.
    m = jnp.max(logits, axis=-1, keepdims=True)                # [TB, 1]
    l = jnp.sum(jnp.exp(logits - m), axis=-1, keepdims=True)   # [TB, 1]
    lse = m + jnp.log(l)                                       # [TB, 1]

    # Folded loss: sum_j y_ij * (lse_i - logits_ij)  (no [TB, OUT] logprob temp).
    y = y_ref[...]
    row_y = jnp.sum(y, axis=-1, keepdims=True)                 # [TB, 1]
    row_dot = jnp.sum(y * logits, axis=-1, keepdims=True)      # [TB, 1]
    per_row = row_y * lse - row_dot                            # [TB, 1]

    tile_loss = jnp.sum(per_row, axis=0, keepdims=True)        # [1, 1]
    # Lane-dense, (8,128)-aligned partial-sum block -> unmasked vector store.
    out_ref[...] = jnp.broadcast_to(tile_loss, (8, 128))


def _round_up(v, m):
    return ((v + m - 1) // m) * m


def _choose_batch_tile(b8, in_size, out_p, budget_bytes=40 * 1024 * 1024, max_tb=1024):
    """Largest multiple-of-8 batch tile whose VMEM working set fits the budget."""
    tb = max(8, min((b8 // 8) * 8, max_tb))
    while tb > 8:
        # 2x double-buffered x and y tiles, 2x weight/bias, ~1x f32 logits temp.
        live = (2 * tb * in_size + 3 * tb * out_p + 2 * in_size * out_p + 2 * out_p) * 4
        if live <= budget_bytes:
            break
        tb = max(8, ((tb // 2) // 8) * 8)
    return tb


def soft_logistic_forward(x, weight, bias, y, *, compute_dtype=jnp.float32,
                          batch_tile=None):
    """x: [B, in], weight: [out, in], bias: [out], y: [B, out] -> scalar loss."""
    B, in_size = x.shape
    out_size = weight.shape[0]

    out_p = _round_up(out_size, 128)          # lane-dense logits / y / W^T tiles
    b8 = _round_up(B, 8)
    if batch_tile is None:
        tb = _choose_batch_tile(b8, in_size, out_p)
    else:
        tb = max(8, _round_up(int(batch_tile), 8))
    b_pad = _round_up(B, tb)
    num_tiles = b_pad // tb

    # TODO(synk): keep the parameter stored as W^T [in, out] so this transpose
    # (a full HBM read+write for large weights) is not re-done per call.
    w_t = jnp.pad(weight.T, ((0, 0), (0, out_p - out_size)))
    b2d = jnp.pad(bias.reshape(1, out_size), ((0, 0), (0, out_p - out_size)),
                  constant_values=_NEG_LARGE)
    x_p = jnp.pad(x, ((0, b_pad - B), (0, 0)))
    y_p = jnp.pad(y, ((0, b_pad - B), (0, out_p - out_size)))

    kernel = functools.partial(_soft_logistic_kernel, compute_dtype=compute_dtype)

    out = pl.pallas_call(
        kernel,
        out_shape=jax.ShapeDtypeStruct((num_tiles * 8, 128), jnp.float32),
        grid_spec=pltpu.PrefetchScalarGridSpec(
            num_scalar_prefetch=0,
            grid=(num_tiles,),
            in_specs=[
                pl.BlockSpec((tb, in_size), lambda i: (i, 0)),     # x tile
                pl.BlockSpec((in_size, out_p), lambda i: (0, 0)),  # W^T (replicated)
                pl.BlockSpec((1, out_p), lambda i: (0, 0)),        # bias (replicated)
                pl.BlockSpec((tb, out_p), lambda i: (i, 0)),       # y tile
            ],
            out_specs=pl.BlockSpec((8, 128), lambda i: (i, 0)),    # per-tile partial
        ),
        compiler_params=pltpu.CompilerParams(
            dimension_semantics=("parallel",),
            vmem_limit_bytes=48 * 1024 * 1024,
        ),
    )(x_p, w_t, b2d, y_p)

    partials = out.reshape(num_tiles, 8, 128)[:, 0, 0]
    return jnp.sum(partials)


def _reference_forward(x, weight, bias, y):
    logits = x @ weight.T + bias
    logprob = jax.nn.log_softmax(logits, axis=-1)
    return jnp.sum(-logprob * y)


if __name__ == "__main__":
    key = jax.random.PRNGKey(0)
    kx, ky, kw, kb, kx2, ky2 = jax.random.split(key, 6)

    in_size, out_size, batch = 32, 16, 8
    bound = 1.0 / (in_size ** 0.5)
    weight = jax.random.uniform(kw, (out_size, in_size), jnp.float32, -bound, bound)
    bias = jax.random.uniform(kb, (out_size,), jnp.float32, -bound, bound)

    x = jax.random.normal(kx, (batch, in_size), jnp.float32)
    y = jax.nn.softmax(jax.random.normal(ky, (batch, out_size), jnp.float32), axis=-1)

    fwd = jax.jit(soft_logistic_forward,
                  static_argnames=("compute_dtype", "batch_tile"))

    # f32 matmul path (tight check against the reference).
    out_f32 = jax.block_until_ready(fwd(x, weight, bias, y))
    ref = _reference_forward(x, weight, bias, y)
    assert jnp.allclose(out_f32, ref, rtol=1e-5, atol=1e-5), (out_f32, ref)

    # bf16 MXU path (v6e/v7x peak) — looser tolerance for the cast operands.
    out_bf16 = jax.block_until_ready(fwd(x, weight, bias, y,
                                         compute_dtype=jnp.bfloat16))
    assert jnp.allclose(out_bf16, ref, rtol=5e-2, atol=5e-2), (out_bf16, ref)

    # Multi-tile batch grid: exercises batch padding, per-tile partial sums and
    # the "parallel" grid axis (num_tiles = 4).
    big_batch = 200
    x2 = jax.random.normal(kx2, (big_batch, in_size), jnp.float32)
    y2 = jax.nn.softmax(jax.random.normal(ky2, (big_batch, out_size), jnp.float32),
                        axis=-1)
    out_big = jax.block_until_ready(fwd(x2, weight, bias, y2, batch_tile=64))
    ref_big = _reference_forward(x2, weight, bias, y2)
    assert jnp.allclose(out_big, ref_big, rtol=1e-4, atol=1e-2), (out_big, ref_big)

    print("KERNEL_OK")
</pallas_src>

<mosaic_0001>
module attributes {stable_mosaic.version = 11 : i64} {
  func.func @_soft_logistic_kernel(%arg0: i32, %arg1: memref<8x32xf32, #tpu.memory_space<vmem>>, %arg2: memref<32x128xf32, #tpu.memory_space<vmem>>, %arg3: memref<1x128xf32, #tpu.memory_space<vmem>>, %arg4: memref<8x128xf32, #tpu.memory_space<vmem>>, %arg5: memref<8x128xf32, #tpu.memory_space<vmem>>) attributes {dimension_semantics = [#tpu.dimension_semantics<parallel>], iteration_bounds = array<i64: 1>, scalar_prefetch = 0 : i64, scratch_operands = 0 : i64, tpu.core_type = #tpu.core_type<tc>, window_params = [{transform_indices = @transform_0, window_bounds = array<i64: 8, 32>}, {pipeline_mode = #tpu.pipeline_mode<synchronous>, transform_indices = @transform_1, window_bounds = array<i64: 32, 128>}, {pipeline_mode = #tpu.pipeline_mode<synchronous>, transform_indices = @transform_2, window_bounds = array<i64: 1, 128>}, {transform_indices = @transform_3, window_bounds = array<i64: 8, 128>}, {transform_indices = @transform_4, window_bounds = array<i64: 8, 128>}]} {
    %c0 = arith.constant 0 : index
    %c0_0 = arith.constant 0 : index
    %0 = vector.load %arg1[%c0, %c0_0] : memref<8x32xf32, #tpu.memory_space<vmem>>, vector<8x32xf32>
    %c0_1 = arith.constant 0 : index
    %c0_2 = arith.constant 0 : index
    %1 = vector.load %arg2[%c0_1, %c0_2] : memref<32x128xf32, #tpu.memory_space<vmem>>, vector<32x128xf32>
    %cst = arith.constant dense<0.000000e+00> : vector<8x128xf32>
    %2 = tpu.matmul %0, %1, %cst {dimension_numbers = #tpu.dot_dimension_numbers<[1], [0], [0], [1], [0, 0, 1, 1], [], []>} : vector<8x32xf32>, vector<32x128xf32>, vector<8x128xf32> -> vector<8x128xf32>
    %c0_3 = arith.constant 0 : index
    %c0_4 = arith.constant 0 : index
    %3 = vector.load %arg3[%c0_3, %c0_4] : memref<1x128xf32, #tpu.memory_space<vmem>>, vector<1x128xf32>
    %4 = vector.broadcast %3 : vector<1x128xf32> to vector<8x128xf32>
    %5 = arith.addf %2, %4 : vector<8x128xf32>
    %cst_5 = arith.constant dense<0xFF800000> : vector<8xf32>
    %6 = vector.multi_reduction <maximumf>, %5, %cst_5 [1] : vector<8x128xf32> to vector<8xf32>
    %7 = vector.shape_cast %6 : vector<8xf32> to vector<8x1xf32>
    %8 = vector.broadcast %7 : vector<8x1xf32> to vector<8x128xf32>
    %9 = arith.subf %5, %8 : vector<8x128xf32>
    %10 = math.exp %9 : vector<8x128xf32>
    %cst_6 = arith.constant dense<0.000000e+00> : vector<8xf32>
    %11 = vector.multi_reduction <add>, %10, %cst_6 [1] : vector<8x128xf32> to vector<8xf32>
    %12 = vector.shape_cast %11 : vector<8xf32> to vector<8x1xf32>
    %13 = math.log %12 : vector<8x1xf32>
    %14 = arith.addf %7, %13 : vector<8x1xf32>
    %c0_7 = arith.constant 0 : index
    %c0_8 = arith.constant 0 : index
    %15 = vector.load %arg4[%c0_7, %c0_8] : memref<8x128xf32, #tpu.memory_space<vmem>>, vector<8x128xf32>
    %cst_9 = arith.constant dense<0.000000e+00> : vector<8xf32>
    %16 = vector.multi_reduction <add>, %15, %cst_9 [1] : vector<8x128xf32> to vector<8xf32>
    %17 = vector.shape_cast %16 : vector<8xf32> to vector<8x1xf32>
    %18 = arith.mulf %15, %5 : vector<8x128xf32>
    %cst_10 = arith.constant dense<0.000000e+00> : vector<8xf32>
    %19 = vector.multi_reduction <add>, %18, %cst_10 [1] : vector<8x128xf32> to vector<8xf32>
    %20 = vector.shape_cast %19 : vector<8xf32> to vector<8x1xf32>
    %21 = arith.mulf %17, %14 : vector<8x1xf32>
    %22 = arith.subf %21, %20 : vector<8x1xf32>
    %cst_11 = arith.constant dense<0.000000e+00> : vector<1xf32>
    %23 = vector.multi_reduction <add>, %22, %cst_11 [0] : vector<8x1xf32> to vector<1xf32>
    %24 = vector.shape_cast %23 : vector<1xf32> to vector<1x1xf32>
    %25 = vector.shape_cast %24 : vector<1x1xf32> to vector<1x1xf32>
    %26 = vector.broadcast %25 : vector<1x1xf32> to vector<8x128xf32>
    %c0_12 = arith.constant 0 : index
    %c0_13 = arith.constant 0 : index
    %27 = vector.load %arg5[%c0_12, %c0_13] : memref<8x128xf32, #tpu.memory_space<vmem>>, vector<8x128xf32>
    tpu.vector_store %arg5[%c0_12, %c0_13], %26 {strides = array<i32>} : memref<8x128xf32, #tpu.memory_space<vmem>>, vector<8x128xf32>,
    return
  }
  func.func @transform_0(%arg0: i32) -> (i32, i32) {
    %c0_i32 = arith.constant 0 : i32
    %c0_i32_0 = arith.constant 0 : i32
    return %arg0, %c0_i32 : i32, i32
  }
  func.func @transform_1(%arg0: i32) -> (i32, i32) {
    %c0_i32 = arith.constant 0 : i32
    %c0_i32_0 = arith.constant 0 : i32
    %c0_i32_1 = arith.constant 0 : i32
    return %c0_i32, %c0_i32_0 : i32, i32
  }
  func.func @transform_2(%arg0: i32) -> (i32, i32) {
    %c0_i32 = arith.constant 0 : i32
    %c0_i32_0 = arith.constant 0 : i32
    %c0_i32_1 = arith.constant 0 : i32
    return %c0_i32, %c0_i32_0 : i32, i32
  }
  func.func @transform_3(%arg0: i32) -> (i32, i32) {
    %c0_i32 = arith.constant 0 : i32
    %c0_i32_0 = arith.constant 0 : i32
    return %arg0, %c0_i32 : i32, i32
  }
  func.func @transform_4(%arg0: i32) -> (i32, i32) {
    %c0_i32 = arith.constant 0 : i32
    %c0_i32_0 = arith.constant 0 : i32
    return %arg0, %c0_i32 : i32, i32
  }
}

</mosaic_0001>

<llo_original>
// kernel: soft_logistic_forward.1
$region0: #{soft_logistic_forward.1}
  #allocation0 [shape = 'u32[]', space=smem, size = 0x4, offset = 0x4, fixed_abs, tag = 'smem constant byte address 0x4 - core index']
  #allocation1 [shape = 'u32[144,128]{1,0:T(1,128)}', space=vmem, size = 0x12000, scoped, tag = 'internal scratch']
  %s0 = inlined_call_operand.vmem [shape: f32[8,32], index: 0, kind: input, shape index: {}]
  %s1 = inlined_call_operand.vmem [shape: f32[32,128], index: 1, kind: input, shape index: {}]
  %s2 = inlined_call_operand.vmem [shape: f32[1,128], index: 2, kind: input, shape index: {}]
  %s3 = inlined_call_operand.vmem [shape: f32[8,128], index: 3, kind: input, shape index: {}]
  %s4 = inlined_call_operand.vmem [shape: f32[8,128], index: 4, kind: output, shape index: {}]
  %s5 = sld [smem:[#allocation0]]
  $region26: #{soft_logistic_forward.1} parent=0
    _
  %s7 = ssub.s32 1, %s5
  %s8 = scalar_select 0, %s7, %s5
  // Predicated region
  $region2: #{soft_logistic_forward.1} parent=0 // pred_check
    _
  $region3: #{soft_logistic_forward.1} parent=0 // pred_check_branch
    %10 = sbr.rel (0) target = $region5
  $region4: #{soft_logistic_forward.1} parent=0 // pred_region
    _
  $region5: #{soft_logistic_forward.1} parent=0 // pred_fallthru
    _
  // Predicated region
  $region6: #{soft_logistic_forward.1} parent=0 // pred_check
    _
  $region7: #{soft_logistic_forward.1} parent=0 // pred_check_branch
    %12 = sbr.rel (0) target = $region9
  $region8: #{soft_logistic_forward.1} parent=0 // pred_region
    _
  $region9: #{soft_logistic_forward.1} parent=0 // pred_fallthru
    _
  // Predicated region
  $region10: #{soft_logistic_forward.1} parent=0 // pred_check
    _
  $region11: #{soft_logistic_forward.1} parent=0 // pred_check_branch
    %14 = sbr.rel (0) target = $region13
  $region12: #{soft_logistic_forward.1} parent=0 // pred_region
    _
  $region13: #{soft_logistic_forward.1} parent=0 // pred_fallthru
    _
  // Predicated region
  $region14: #{soft_logistic_forward.1} parent=0 // pred_check
    _
  $region15: #{soft_logistic_forward.1} parent=0 // pred_check_branch
    %16 = sbr.rel (0) target = $region17
  $region16: #{soft_logistic_forward.1} parent=0 // pred_region
    _
  $region17: #{soft_logistic_forward.1} parent=0 // pred_fallthru
    _
  %v17 = vld [vmem:[%s0] sm:$0xff]
  %v18 = vld [vmem:[%s1] sm:$0xff]
  %v19 = vld [vmem:[%s1 + $0x8] sm:$0xff]
  %v20 = vld [vmem:[%s1 + $0x10] sm:$0xff]
  %v21 = vld [vmem:[%s1 + $0x18] sm:$0xff]
  %v22 = vld [vmem:[%s2] sm:$0x1]
  %v24 = vlaneseq
  %v25 = vshrl.u32 %v24, 7
  %v26 = vsub.s32 0, %v25
  %v27 = vrot.slane %v22, %v26
  %vm29 = vcmask 261120
  %v31 = vsel %vm29, %v17, 0
  %33 = vmatprep.subr.mxu0 0.0
  %34 = vmatpush1.msra.mxu0 %v18
  %35 = vmatprep.subr.mxu0 0.0
  %36 = vmatpush1.msra.mxu0 %v19
  %37 = vmatprep.subr.mxu0 0.0
  %38 = vmatpush1.msra.mxu0 %v20
  %39 = vmatprep.subr.mxu0 0.0
  %40 = vmatpush1.msra.mxu0 %v21
  %41 = vmatprep.subr.mxu0 0.0
  %42 = vmatpush1.msra.mxu0 0.0
  %43 = vmatprep.subr.mxu0 0.0
  %44 = vmatpush1.msra.mxu0 0.0
  %45 = vmatprep.subr.mxu0 0.0
  %46 = vmatpush1.msra.mxu0 0.0
  %47 = vmatprep.subr.mxu0 0.0
  %48 = vmatpush1.msra.mxu0 0.0
  %49 = vmatprep.subr.mxu0 0.0
  %50 = vmatpush1.msra.mxu0 0.0
  %51 = vmatprep.subr.mxu0 0.0
  %52 = vmatpush1.msra.mxu0 0.0
  %53 = vmatprep.subr.mxu0 0.0
  %54 = vmatpush1.msra.mxu0 0.0
  %55 = vmatprep.subr.mxu0 0.0
  %56 = vmatpush1.msra.mxu0 0.0
  %57 = vmatprep.subr.mxu0 0.0
  %58 = vmatpush1.msra.mxu0 0.0
  %59 = vmatprep.subr.mxu0 0.0
  %60 = vmatpush1.msra.mxu0 0.0
  %61 = vmatprep.subr.mxu0 0.0
  %62 = vmatpush1.msra.mxu0 0.0
  %63 = vmatprep.subr.mxu0 0.0
  %64 = vmatpush1.msra.mxu0 0.0
  %65 = vmatprep.subr.mxu0 0.0
  %66 = vmatpush1.msra.mxu0 0.0
  %67 = vmatprep.subr.mxu0 0.0
  %68 = vmatpush1.msra.mxu0 0.0
  %69 = vmatprep.subr.mxu0 0.0
  %70 = vmatpush1.msra.mxu0 0.0
  %71 = vmatprep.subr.mxu0 0.0
  %72 = vmatpush1.msra.mxu0 0.0
  %73 = vmatprep.subr.mxu0 0.0
  %74 = vmatpush1.msra.mxu0 0.0
  %75 = vmatprep.subr.mxu0 0.0
  %76 = vmatpush1.msra.mxu0 0.0
  %77 = vmatprep.subr.mxu0 0.0
  %78 = vmatpush1.msra.mxu0 0.0
  %79 = vmatprep.subr.mxu0 0.0
  %80 = vmatpush1.msra.mxu0 0.0
  %81 = vmatprep.subr.mxu0 0.0
  %82 = vmatpush1.msra.mxu0 0.0
  %83 = vmatprep.subr.mxu0 0.0
  %84 = vmatpush1.msra.mxu0 0.0
  %85 = vmatprep.subr.mxu0 0.0
  %86 = vmatpush1.msra.mxu0 0.0
  %87 = vmatprep.subr.mxu0 0.0
  %88 = vmatpush1.msra.mxu0 0.0
  %89 = vmatprep.subr.mxu0 0.0
  %90 = vmatpush1.msra.mxu0 0.0
  %91 = vmatprep.subr.mxu0 0.0
  %92 = vmatpush1.msra.mxu0 0.0
  %93 = vmatprep.subr.mxu0 0.0
  %94 = vmatpush1.msra.mxu0 0.0
  %95 = vmatprep.subr.mxu0 0.0
  %96 = vmatpush1.msra.mxu0 0.0
  %97 = vmatprep.mubr.f32.mxu0 0.0
  %98 = vmatmul.mubr.f32.gmra.mrb[0].mxu0 %v31
  %v99 = vpop.f32.mrb[0].mxu0
  %v100 = vadd.f32 %v27, %v99
  %v101 = vpop.f32.mrb[0].mxu0
  %102 = vdwg.mxu0
  %103 = vmax.xlane.f32.xlu0 %v100
  %v104 = vpop.xlane.xlu0 %103
  %v105 = vsub.f32 %v100, %v104
  %v106 = vmul.f32 %v105, 1.442695
  %v107 = vpow.pop %v106
  %108 = vadd.xlane.f32.xlu0 %v107
  %v109 = vpop.xlane.xlu0 %108
  %v110 = vlog2.pop %v109
  %v111 = vmul.f32 %v110, 0.6931472
  %v112 = vadd.f32 %v104, %v111
  %v113 = vld [vmem:[%s3] sm:$0xff]
  %114 = vadd.xlane.f32.xlu0 %v113
  %v115 = vpop.xlane.xlu0 %114
  %v116 = vmul.f32 %v113, %v100
  %117 = vadd.xlane.f32.xlu0 %v116
  %v118 = vpop.xlane.xlu0 %117
  %v119 = vmul.f32 %v115, %v112
  %v120 = vsub.f32 %v119, %v118
  %v121 = vrot.slane %v120, 4
  %v122 = vadd.f32 %v120, %v121
  %v123 = vrot.slane %v122, 2
  %v124 = vadd.f32 %v122, %v123
  %v125 = vrot.slane %v124, 1
  %v126 = vadd.f32 %v124, %v125
  %127 = vst [vmem:[%s4] sm:$0xff] %v126
  // Predicated region
  $region18: #{soft_logistic_forward.1} parent=0 // pred_check
    _
  $region19: #{soft_logistic_forward.1} parent=0 // pred_check_branch
    %129 = sbr.rel (0) target = $region21
  $region20: #{soft_logistic_forward.1} parent=0 // pred_region
    _
  $region21: #{soft_logistic_forward.1} parent=0 // pred_fallthru
    _
  // Predicated region
  $region22: #{soft_logistic_forward.1} parent=0 // pred_check
    _
  $region23: #{soft_logistic_forward.1} parent=0 // pred_check_branch
    %131 = sbr.rel (0) target = $region25
  $region24: #{soft_logistic_forward.1} parent=0 // pred_region
    _
  $region25: #{soft_logistic_forward.1} parent=0 // pred_fallthru
    _

</llo_original>
